<compile_context>
chip_gen: v7x
topology: tpu7x:2x2x1
jax: 0.10.0
libtpu: 0.0.40
codegen_flags: <defaults>
</compile_context>

<pallas_src>
import functools
import math

import jax
import jax.numpy as jnp
import numpy as np
from jax.experimental import pallas as pl
from jax.experimental.pallas import tpu as pltpu


# ---------------------------------------------------------------------------
# Shared in-kernel math (operates on values already loaded from refs)
# ---------------------------------------------------------------------------
def _stats_and_prep(X, M, M_rep, p_rows, w_bd, b_bd, *, input_size, var_eps,
                    mxu_dtype):
    """p-only section: obs stats, loss/mse, prep projection -> gru_in."""
    I = input_size
    mean = p_rows[:, :I]
    var = jnp.abs(p_rows[:, I:]) + var_eps
    inv_std = jax.lax.rsqrt(var)
    diff = X - mean
    diff2 = diff * diff
    error = diff * inv_std

    # mse and loss share diff^2 and one cross-sublane reduction.
    terms = jnp.concatenate(
        [diff2 * M, (error * error + jnp.log(var)) * M], axis=1)   # (n, 2I)
    partial = jnp.sum(terms, axis=0, keepdims=True)                # (1, 2I)
    mse = jnp.sum(partial[:, :I], axis=1, keepdims=True)           # (1, 1)
    loss = 0.5 * jnp.sum(partial[:, I:], axis=1, keepdims=True)    # (1, 1)

    # Per-feature (4 -> P) prep projections as ONE block-diagonal matmul.
    # TODO(synk): W_bd is (4I, I*P) with only I diagonal blocks nonzero, so MXU
    # / VMEM cost grows O(I^2 P); fine for small I, restructure if I >> 16.
    G = jnp.concatenate([X, mean, var, error], axis=1)             # (n, 4I)
    pre = jnp.dot(G.astype(mxu_dtype), w_bd,
                  preferred_element_type=jnp.float32) + b_bd       # (n, I*P)
    gru_in = jnp.maximum(pre, 0.0) * M_rep                         # relu + mask
    return gru_in, loss, mse


def _gru_cell(gru_in, h_rows, w_gx, b_gx, w_gh, b_gh, *, hidden_size,
              mxu_dtype):
    """PyTorch GRUCell (gate order r, z, n) via two accumulating MXU dots."""
    H = hidden_size
    gx = jnp.dot(gru_in.astype(mxu_dtype), w_gx,
                 preferred_element_type=jnp.float32) + b_gx        # (n, 3H)
    gh = jnp.dot(h_rows.astype(mxu_dtype), w_gh,
                 preferred_element_type=jnp.float32) + b_gh        # (n, 3H)
    rz = jax.nn.sigmoid(gx[:, :2 * H] + gh[:, :2 * H])             # packed [r|z]
    r = rz[:, :H]
    z = rz[:, H:]
    n_gate = jnp.tanh(gx[:, 2 * H:] + r * gh[:, 2 * H:])
    return (1.0 - z) * n_gate + z * h_rows


# ---------------------------------------------------------------------------
# Path A: small state — h and p fully VMEM-resident, one-hot gather/scatter
# ---------------------------------------------------------------------------
def _obs_cell_small_kernel(
    idx_col_ref,  # (n_obs, 1) int32 VMEM
    idx_row_ref,  # (1, n_obs) int32 VMEM
    x_ref,        # (n_obs, I)       VMEM
    m_ref,        # (n_obs, I)       VMEM
    mrep_ref,     # (n_obs, I*P)     VMEM
    p_ref,        # (N, 2I)          VMEM (whole array, one bulk DMA)
    h_ref,        # (N, H)           VMEM (whole array, one bulk DMA)
    w_bd_ref, b_bd_ref, w_gx_ref, b_gx_ref, w_gh_ref, b_gh_ref,
    h_out_ref,    # (N, H)           VMEM (whole array written back once)
    loss_ref,     # (1, 1)           VMEM
    mse_ref,      # (1, 1)           VMEM
    *, input_size, prep_hidden, hidden_size, var_eps, mxu_dtype):
    del prep_hidden
    n_obs = x_ref.shape[0]
    N = h_ref.shape[0]

    h_all = h_ref[...].astype(jnp.float32)
    p_all = p_ref[...].astype(jnp.float32)

    # One-hot gather (kept in f32 so selected rows are reproduced exactly).
    sel = (jax.lax.broadcasted_iota(jnp.int32, (n_obs, N), 1)
           == idx_col_ref[...]).astype(jnp.float32)                # (n_obs, N)
    p_rows = jnp.dot(sel, p_all, preferred_element_type=jnp.float32)
    h_rows = jnp.dot(sel, h_all, preferred_element_type=jnp.float32)

    gru_in, loss, mse = _stats_and_prep(
        x_ref[...], m_ref[...], mrep_ref[...], p_rows,
        w_bd_ref[...], b_bd_ref[...],
        input_size=input_size, var_eps=var_eps, mxu_dtype=mxu_dtype)
    loss_ref[...] = loss
    mse_ref[...] = mse

    hn = _gru_cell(gru_in, h_rows, w_gx_ref[...], b_gx_ref[...],
                   w_gh_ref[...], b_gh_ref[...],
                   hidden_size=hidden_size, mxu_dtype=mxu_dtype)

    # One-hot scatter: h_out = h on unobserved rows, hn on observed rows.
    # Duplicate i_obs entries would double-count (torch index-put ambiguity).
    scat = (jax.lax.broadcasted_iota(jnp.int32, (N, n_obs), 0)
            == idx_row_ref[...]).astype(jnp.float32)               # (N, n_obs)
    covered = jnp.sum(scat, axis=1, keepdims=True)                 # (N, 1)
    h_new = h_all * (1.0 - covered) + jnp.dot(
        scat, hn, preferred_element_type=jnp.float32)
    h_out_ref[...] = h_new.astype(h_out_ref.dtype)


# ---------------------------------------------------------------------------
# Path B: large state — h/p stay in HBM, manual row DMAs, in-place row scatter
# ---------------------------------------------------------------------------
def _obs_cell_rowdma_kernel(
    i_ref,        # (n_obs,) int32  SMEM
    x_ref,        # (n_obs, I)      VMEM
    m_ref,        # (n_obs, I)      VMEM
    mrep_ref,     # (n_obs, I*P)    VMEM
    p_hbm,        # (N, 2I)         ANY (HBM)
    h_hbm,        # (N, H)          ANY (HBM, aliased with output 0)
    w_bd_ref, b_bd_ref, w_gx_ref, b_gx_ref, w_gh_ref, b_gh_ref,
    h_out_hbm,    # (N, H)          ANY (aliased with h_hbm -> in-place rows)
    loss_ref,     # (1, 1)          VMEM
    mse_ref,      # (1, 1)          VMEM
    # scratch
    p_buf,        # (n_obs, 2I)     VMEM, dtype = p.dtype
    h_buf,        # (n_obs, H)      VMEM, dtype = h.dtype
    hn_buf,       # (n_obs, H)      VMEM, dtype = h.dtype
    sem_p, sem_h, sem_s,            # one DMA semaphore per stream
    *, input_size, prep_hidden, hidden_size, var_eps, mxu_dtype):
    del prep_hidden
    n_obs = x_ref.shape[0]

    # Issue all row gathers up front (p and h streams on separate semaphores).
    @pl.loop(0, n_obs)
    def _(j):
        row = i_ref[j]
        pltpu.make_async_copy(p_hbm.at[pl.ds(row, 1)],
                              p_buf.at[pl.ds(j, 1)], sem_p).start()
        pltpu.make_async_copy(h_hbm.at[pl.ds(row, 1)],
                              h_buf.at[pl.ds(j, 1)], sem_h).start()

    # Wait ONLY for the p rows here; the h rows keep flying and their latency
    # hides under the stats / prep-matmul work below (review item #1).
    # NOTE: every row copy has identical size, so a row-0-shaped wait
    # descriptor consumes exactly one completed row copy per wait.
    @pl.loop(0, n_obs)
    def _(j):
        del j
        pltpu.make_async_copy(p_hbm.at[pl.ds(0, 1)],
                              p_buf.at[pl.ds(0, 1)], sem_p).wait()

    gru_in, loss, mse = _stats_and_prep(
        x_ref[...], m_ref[...], mrep_ref[...],
        p_buf[...].astype(jnp.float32),
        w_bd_ref[...], b_bd_ref[...],
        input_size=input_size, var_eps=var_eps, mxu_dtype=mxu_dtype)
    loss_ref[...] = loss
    mse_ref[...] = mse

    # Now consume the h-row gathers (latency already overlapped).
    @pl.loop(0, n_obs)
    def _(j):
        del j
        pltpu.make_async_copy(h_hbm.at[pl.ds(0, 1)],
                              h_buf.at[pl.ds(0, 1)], sem_h).wait()

    h_rows = h_buf[...].astype(jnp.float32)
    hn = _gru_cell(gru_in, h_rows, w_gx_ref[...], b_gx_ref[...],
                   w_gh_ref[...], b_gh_ref[...],
                   hidden_size=hidden_size, mxu_dtype=mxu_dtype)
    hn_buf[...] = hn.astype(hn_buf.dtype)

    # Scatter updated rows back in place (h_out_hbm is aliased with h_hbm).
    # TODO(synk): for very large n_obs, sort i_obs host-side and coalesce
    # contiguous destination rows into multi-row DMAs / tile over a grid with
    # dimension_semantics=("parallel",) so both v7x TensorCores are used.
    @pl.loop(0, n_obs)
    def _(j):
        row = i_ref[j]
        pltpu.make_async_copy(hn_buf.at[pl.ds(j, 1)],
                              h_out_hbm.at[pl.ds(row, 1)], sem_s).start()

    @pl.loop(0, n_obs)
    def _(j):
        del j
        pltpu.make_async_copy(hn_buf.at[pl.ds(0, 1)],
                              h_out_hbm.at[pl.ds(0, 1)], sem_s).wait()


# ---------------------------------------------------------------------------
# Host-side weight preparation (cheap; runs under jit once per shape/dtype)
# ---------------------------------------------------------------------------
def _prep_weights(params, input_size, prep_hidden, hidden_size, mxu_dtype):
    I, P, H = input_size, prep_hidden, hidden_size
    IP = I * P

    # Block-diagonal prep weight so that
    #   [X | mean | var | error] (n, 4I) @ W_bd (4I, I*P)
    # reproduces the per-feature (4 -> P) projections, output col = i*P + p.
    wp = jnp.transpose(params["w_prep"].astype(jnp.float32), (1, 0, 2))  # (4,I,P)
    eye = jnp.eye(I, dtype=jnp.float32)
    w_bd = jnp.einsum("fjp,ij->fijp", wp, eye).reshape(4 * I, IP)
    b_bd = params["bias_prep"].astype(jnp.float32).reshape(1, IP)

    # Two separate GRU weights (no zero-padded fused block): column order [r|z|n].
    w_gx = params["w_ih"].astype(jnp.float32).T                    # (IP, 3H)
    w_gh = params["w_hh"].astype(jnp.float32).T                    # (H, 3H)
    b_gx = params["b_ih"].astype(jnp.float32).reshape(1, 3 * H)
    b_gh = params["b_hh"].astype(jnp.float32).reshape(1, 3 * H)

    return (w_bd.astype(mxu_dtype), b_bd, w_gx.astype(mxu_dtype), b_gx,
            w_gh.astype(mxu_dtype), b_gh)


# ---------------------------------------------------------------------------
# Wrapper
# ---------------------------------------------------------------------------
@functools.partial(
    jax.jit,
    static_argnames=("input_size", "prep_hidden", "hidden_size", "var_eps",
                     "mxu_dtype", "force_row_dma"))
def gru_observation_cell(h, p, X_obs, M_obs, i_obs, params, *,
                         input_size, prep_hidden, hidden_size,
                         var_eps=1e-6, mxu_dtype=jnp.bfloat16,
                         force_row_dma=False):
    """Forward pass of GRUObservationCell.  Returns (h_new, loss, mse).

    mxu_dtype: operand dtype for the MXU matmuls (bfloat16 recommended on
    v5e/v6e/v7x; float32 only for tight numerical checks).  Accumulation is
    always float32.  i_obs entries must be distinct.
    """
    n_obs = X_obs.shape[0]
    N, H = h.shape
    I, P = input_size, prep_hidden

    w_bd, b_bd, w_gx, b_gx, w_gh, b_gh = _prep_weights(
        params, I, P, H, mxu_dtype)

    X_obs = X_obs.astype(jnp.float32)
    M_obs = M_obs.astype(jnp.float32)
    # Prep mask expanded to the (n, I*P) lane layout outside the kernel
    # (avoids an in-kernel broadcast/reshape relayout).
    M_rep = jnp.repeat(M_obs, P, axis=1)

    vmem = pl.BlockSpec(memory_space=pltpu.MemorySpace.VMEM)
    smem = pl.BlockSpec(memory_space=pltpu.MemorySpace.SMEM)
    anyspace = pl.BlockSpec(memory_space=pl.ANY)

    out_shape = (
        jax.ShapeDtypeStruct((N, H), h.dtype),      # updated hidden state
        jax.ShapeDtypeStruct((1, 1), jnp.float32),  # loss
        jax.ShapeDtypeStruct((1, 1), jnp.float32),  # mse
    )

    # Small-state fast path: whole h and p comfortably fit in VMEM.
    # TODO(synk): at production sizes also set vmem_limit_bytes explicitly so
    # weights + buffers stay within v7x's 64 MiB / v5e's 16 MiB default scope.
    state_bytes = N * (H + 2 * I) * h.dtype.itemsize
    use_small = (not force_row_dma) and state_bytes <= (2 << 20)

    if use_small:
        i32 = i_obs.astype(jnp.int32)
        kernel = functools.partial(
            _obs_cell_small_kernel, input_size=I, prep_hidden=P,
            hidden_size=H, var_eps=var_eps, mxu_dtype=mxu_dtype)
        h_out, loss, mse = pl.pallas_call(
            kernel,
            out_shape=out_shape,
            in_specs=[vmem] * 13,
            out_specs=(vmem, vmem, vmem),
        )(i32.reshape(n_obs, 1), i32.reshape(1, n_obs),
          X_obs, M_obs, M_rep, p, h,
          w_bd, b_bd, w_gx, b_gx, w_gh, b_gh)
    else:
        kernel = functools.partial(
            _obs_cell_rowdma_kernel, input_size=I, prep_hidden=P,
            hidden_size=H, var_eps=var_eps, mxu_dtype=mxu_dtype)
        h_out, loss, mse = pl.pallas_call(
            kernel,
            out_shape=out_shape,
            in_specs=[smem, vmem, vmem, vmem, anyspace, anyspace,
                      vmem, vmem, vmem, vmem, vmem, vmem],
            out_specs=(anyspace, vmem, vmem),
            scratch_shapes=[
                pltpu.VMEM((n_obs, 2 * I), p.dtype),
                pltpu.VMEM((n_obs, H), h.dtype),
                pltpu.VMEM((n_obs, H), h.dtype),
                pltpu.SemaphoreType.DMA,   # p-gather stream
                pltpu.SemaphoreType.DMA,   # h-gather stream
                pltpu.SemaphoreType.DMA,   # scatter stream
            ],
            input_output_aliases={5: 0},   # h -> output 0 (in-place rows)
            compiler_params=pltpu.CompilerParams(has_side_effects=True),
        )(i_obs.astype(jnp.int32), X_obs, M_obs, M_rep, p, h,
          w_bd, b_bd, w_gx, b_gx, w_gh, b_gh)

    return h_out, loss[0, 0], mse[0, 0]


# ---------------------------------------------------------------------------
# Pure-JAX reference (mirrors the intended PyTorch forward)
# ---------------------------------------------------------------------------
def ref_forward(h, p, X_obs, M_obs, i_obs, params, *, var_eps=1e-6):
    mean, var = jnp.split(p[i_obs], 2, axis=1)
    var = jnp.abs(var) + var_eps
    error = (X_obs - mean) / jnp.sqrt(var)
    mse = jnp.sum((X_obs - mean) ** 2 * M_obs)
    loss = 0.5 * jnp.sum((error ** 2 + jnp.log(var)) * M_obs)

    g = jnp.stack([X_obs, mean, var, error], axis=2)               # (n, I, 4)
    gi = jnp.einsum("nif,ifp->nip", g, params["w_prep"]) + params["bias_prep"]
    gi = jax.nn.relu(gi)
    gi = gi * M_obs[:, :, None]
    gi = gi.reshape(gi.shape[0], -1)                               # (n, I*P)

    H = params["w_hh"].shape[1]
    gx = gi @ params["w_ih"].T + params["b_ih"]
    gh = h[i_obs] @ params["w_hh"].T + params["b_hh"]
    r = jax.nn.sigmoid(gx[:, :H] + gh[:, :H])
    z = jax.nn.sigmoid(gx[:, H:2 * H] + gh[:, H:2 * H])
    n = jnp.tanh(gx[:, 2 * H:] + r * gh[:, 2 * H:])
    hn = (1.0 - z) * n + z * h[i_obs]
    return h.at[i_obs].set(hn), loss, mse


# ---------------------------------------------------------------------------
# Main
# ---------------------------------------------------------------------------
if __name__ == "__main__":
    input_size = 4
    prep_hidden = 8
    hidden_size = 32
    N = 8
    n_obs = 5

    key = jax.random.PRNGKey(0)
    keys = jax.random.split(key, 10)

    std = math.sqrt(2.0 / (4 + prep_hidden))
    k_gru = 1.0 / math.sqrt(hidden_size)
    D = prep_hidden * input_size

    params = {
        "w_prep": std * jax.random.normal(
            keys[0], (input_size, 4, prep_hidden), jnp.float32),
        "bias_prep": 0.1 + jnp.zeros((input_size, prep_hidden), jnp.float32),
        # gru_d weights (PyTorch GRUCell layout, gate order r, z, n)
        "w_ih": jax.random.uniform(
            keys[1], (3 * hidden_size, D), jnp.float32, -k_gru, k_gru),
        "w_hh": jax.random.uniform(
            keys[2], (3 * hidden_size, hidden_size), jnp.float32, -k_gru, k_gru),
        "b_ih": jax.random.uniform(
            keys[3], (3 * hidden_size,), jnp.float32, -k_gru, k_gru),
        "b_hh": jax.random.uniform(
            keys[4], (3 * hidden_size,), jnp.float32, -k_gru, k_gru),
        # NOTE: gru_debug exists in __init__ but is unused in forward; omitted.
    }

    h = jax.random.normal(keys[5], (N, hidden_size), jnp.float32)
    p = jax.random.normal(keys[6], (N, 2 * input_size), jnp.float32)
    X_obs = jax.random.normal(keys[7], (n_obs, input_size), jnp.float32)
    M_obs = (jax.random.uniform(keys[8], (n_obs, input_size)) > 0.3).astype(jnp.float32)
    i_obs = jnp.array([0, 2, 3, 5, 7], dtype=jnp.int32)   # distinct indices

    h_ref, loss_ref, mse_ref = ref_forward(h, p, X_obs, M_obs, i_obs, params)

    common = dict(input_size=input_size, prep_hidden=prep_hidden,
                  hidden_size=hidden_size)

    # 1) small-state path (bulk VMEM, one-hot gather/scatter), f32 MXU operands.
    h1, l1, m1 = gru_observation_cell(h, p, X_obs, M_obs, i_obs, params,
                                      mxu_dtype=jnp.float32, **common)
    jax.block_until_ready((h1, l1, m1))
    np.testing.assert_allclose(np.asarray(h1), np.asarray(h_ref), rtol=1e-4, atol=1e-4)
    np.testing.assert_allclose(float(l1), float(loss_ref), rtol=1e-4, atol=1e-4)
    np.testing.assert_allclose(float(m1), float(mse_ref), rtol=1e-4, atol=1e-4)

    # 2) row-DMA path (large-state code path, forced here), f32 MXU operands.
    h2, l2, m2 = gru_observation_cell(h, p, X_obs, M_obs, i_obs, params,
                                      mxu_dtype=jnp.float32, force_row_dma=True,
                                      **common)
    jax.block_until_ready((h2, l2, m2))
    np.testing.assert_allclose(np.asarray(h2), np.asarray(h_ref), rtol=1e-4, atol=1e-4)
    np.testing.assert_allclose(float(l2), float(loss_ref), rtol=1e-4, atol=1e-4)
    np.testing.assert_allclose(float(m2), float(mse_ref), rtol=1e-4, atol=1e-4)

    # 3) default bf16 MXU operands (recommended on v5e/v6e/v7x).  loss/mse never
    #    touch the MXU-dtype path so they stay tight; h is checked loosely.
    h3, l3, m3 = gru_observation_cell(h, p, X_obs, M_obs, i_obs, params, **common)
    jax.block_until_ready((h3, l3, m3))
    np.testing.assert_allclose(np.asarray(h3), np.asarray(h_ref), rtol=5e-2, atol=1.5e-1)
    np.testing.assert_allclose(float(l3), float(loss_ref), rtol=1e-4, atol=1e-4)
    np.testing.assert_allclose(float(m3), float(mse_ref), rtol=1e-4, atol=1e-4)

    print("KERNEL_OK")
</pallas_src>

<mosaic_0001>
module attributes {stable_mosaic.version = 11 : i64} {
  func.func @_obs_cell_small_kernel(%arg0: memref<5x1xi32, #tpu.memory_space<vmem>>, %arg1: memref<1x5xi32, #tpu.memory_space<vmem>>, %arg2: memref<5x4xf32, #tpu.memory_space<vmem>>, %arg3: memref<5x4xf32, #tpu.memory_space<vmem>>, %arg4: memref<5x32xf32, #tpu.memory_space<vmem>>, %arg5: memref<8x8xf32, #tpu.memory_space<vmem>>, %arg6: memref<8x32xf32, #tpu.memory_space<vmem>>, %arg7: memref<16x32xf32, #tpu.memory_space<vmem>>, %arg8: memref<1x32xf32, #tpu.memory_space<vmem>>, %arg9: memref<32x96xf32, #tpu.memory_space<vmem>>, %arg10: memref<1x96xf32, #tpu.memory_space<vmem>>, %arg11: memref<32x96xf32, #tpu.memory_space<vmem>>, %arg12: memref<1x96xf32, #tpu.memory_space<vmem>>, %arg13: memref<8x32xf32, #tpu.memory_space<vmem>>, %arg14: memref<1x1xf32, #tpu.memory_space<vmem>>, %arg15: memref<1x1xf32, #tpu.memory_space<vmem>>) attributes {dimension_semantics = [], scalar_prefetch = 0 : i64, scratch_operands = 0 : i64, tpu.core_type = #tpu.core_type<tc>} {
    %c0 = arith.constant 0 : index
    %c0_0 = arith.constant 0 : index
    %0 = vector.load %arg6[%c0, %c0_0] : memref<8x32xf32, #tpu.memory_space<vmem>>, vector<8x32xf32>
    %c0_1 = arith.constant 0 : index
    %c0_2 = arith.constant 0 : index
    %1 = vector.load %arg5[%c0_1, %c0_2] : memref<8x8xf32, #tpu.memory_space<vmem>>, vector<8x8xf32>
    %2 = tpu.iota {dimensions = array<i32: 1>} : vector<5x8xi32>
    %c0_3 = arith.constant 0 : index
    %c0_4 = arith.constant 0 : index
    %3 = vector.load %arg0[%c0_3, %c0_4] : memref<5x1xi32, #tpu.memory_space<vmem>>, vector<5x1xi32>
    %4 = vector.broadcast %3 : vector<5x1xi32> to vector<5x8xi32>
    %5 = arith.cmpi eq, %2, %4 : vector<5x8xi32>
    %6 = arith.extui %5 : vector<5x8xi1> to vector<5x8xi32>
    %7 = arith.sitofp %6 : vector<5x8xi32> to vector<5x8xf32>
    %cst = arith.constant dense<0.000000e+00> : vector<5x8xf32>
    %8 = tpu.matmul %7, %1, %cst {dimension_numbers = #tpu.dot_dimension_numbers<[1], [0], [0], [1], [0, 0, 1, 1], [], []>} : vector<5x8xf32>, vector<8x8xf32>, vector<5x8xf32> -> vector<5x8xf32>
    %cst_5 = arith.constant dense<0.000000e+00> : vector<5x32xf32>
    %9 = tpu.matmul %7, %0, %cst_5 {dimension_numbers = #tpu.dot_dimension_numbers<[1], [0], [0], [1], [0, 0, 1, 1], [], []>} : vector<5x8xf32>, vector<8x32xf32>, vector<5x32xf32> -> vector<5x32xf32>
    %c0_6 = arith.constant 0 : index
    %c0_7 = arith.constant 0 : index
    %10 = vector.load %arg2[%c0_6, %c0_7] : memref<5x4xf32, #tpu.memory_space<vmem>>, vector<5x4xf32>
    %c0_8 = arith.constant 0 : index
    %c0_9 = arith.constant 0 : index
    %11 = vector.load %arg3[%c0_8, %c0_9] : memref<5x4xf32, #tpu.memory_space<vmem>>, vector<5x4xf32>
    %c0_10 = arith.constant 0 : index
    %c0_11 = arith.constant 0 : index
    %12 = vector.load %arg4[%c0_10, %c0_11] : memref<5x32xf32, #tpu.memory_space<vmem>>, vector<5x32xf32>
    %c0_12 = arith.constant 0 : index
    %c0_13 = arith.constant 0 : index
    %13 = vector.load %arg7[%c0_12, %c0_13] : memref<16x32xf32, #tpu.memory_space<vmem>>, vector<16x32xf32>
    %c0_14 = arith.constant 0 : index
    %c0_15 = arith.constant 0 : index
    %14 = vector.load %arg8[%c0_14, %c0_15] : memref<1x32xf32, #tpu.memory_space<vmem>>, vector<1x32xf32>
    %15 = vector.extract_strided_slice %8 {offsets = [0, 0], sizes = [5, 4], strides = [1, 1]} : vector<5x8xf32> to vector<5x4xf32>
    %16 = vector.extract_strided_slice %8 {offsets = [0, 4], sizes = [5, 4], strides = [1, 1]} : vector<5x8xf32> to vector<5x4xf32>
    %17 = math.absf %16 : vector<5x4xf32>
    %cst_16 = arith.constant 9.99999997E-7 : f32
    %18 = vector.broadcast %cst_16 : f32 to vector<5x4xf32>
    %19 = arith.addf %17, %18 : vector<5x4xf32>
    %20 = math.rsqrt %19 : vector<5x4xf32>
    %21 = arith.subf %10, %15 : vector<5x4xf32>
    %22 = arith.mulf %21, %21 : vector<5x4xf32>
    %23 = arith.mulf %21, %20 : vector<5x4xf32>
    %24 = arith.mulf %22, %11 : vector<5x4xf32>
    %25 = arith.mulf %23, %23 : vector<5x4xf32>
    %26 = math.log %19 : vector<5x4xf32>
    %27 = arith.addf %25, %26 : vector<5x4xf32>
    %28 = arith.mulf %27, %11 : vector<5x4xf32>
    %29 = tpu.concatenate %24, %28 in 1 : vector<5x4xf32>, vector<5x4xf32> -> vector<5x8xf32>
    %cst_17 = arith.constant dense<0.000000e+00> : vector<8xf32>
    %30 = vector.multi_reduction <add>, %29, %cst_17 [0] : vector<5x8xf32> to vector<8xf32>
    %31 = vector.shape_cast %30 : vector<8xf32> to vector<1x8xf32>
    %32 = vector.extract_strided_slice %31 {offsets = [0, 0], sizes = [1, 4], strides = [1, 1]} : vector<1x8xf32> to vector<1x4xf32>
    %cst_18 = arith.constant dense<0.000000e+00> : vector<1xf32>
    %33 = vector.multi_reduction <add>, %32, %cst_18 [1] : vector<1x4xf32> to vector<1xf32>
    %34 = vector.shape_cast %33 : vector<1xf32> to vector<1x1xf32>
    %35 = vector.extract_strided_slice %31 {offsets = [0, 4], sizes = [1, 4], strides = [1, 1]} : vector<1x8xf32> to vector<1x4xf32>
    %cst_19 = arith.constant dense<0.000000e+00> : vector<1xf32>
    %36 = vector.multi_reduction <add>, %35, %cst_19 [1] : vector<1x4xf32> to vector<1xf32>
    %37 = vector.shape_cast %36 : vector<1xf32> to vector<1x1xf32>
    %cst_20 = arith.constant 5.000000e-01 : f32
    %38 = vector.broadcast %cst_20 : f32 to vector<1x1xf32>
    %39 = arith.mulf %38, %37 : vector<1x1xf32>
    %40 = tpu.concatenate %10, %15, %19, %23 in 1 : vector<5x4xf32>, vector<5x4xf32>, vector<5x4xf32>, vector<5x4xf32> -> vector<5x16xf32>
    %cst_21 = arith.constant dense<0.000000e+00> : vector<5x32xf32>
    %41 = tpu.matmul %40, %13, %cst_21 {dimension_numbers = #tpu.dot_dimension_numbers<[1], [0], [0], [1], [0, 0, 1, 1], [], []>} : vector<5x16xf32>, vector<16x32xf32>, vector<5x32xf32> -> vector<5x32xf32>
    %42 = vector.broadcast %14 : vector<1x32xf32> to vector<5x32xf32>
    %43 = arith.addf %41, %42 : vector<5x32xf32>
    %cst_22 = arith.constant 0.000000e+00 : f32
    %44 = vector.broadcast %cst_22 : f32 to vector<5x32xf32>
    %45 = arith.maximumf %43, %44 : vector<5x32xf32>
    %46 = arith.mulf %45, %12 : vector<5x32xf32>
    %c0_23 = arith.constant 0 : index
    %c0_24 = arith.constant 0 : index
    %47 = vector.load %arg14[%c0_23, %c0_24] : memref<1x1xf32, #tpu.memory_space<vmem>>, vector<1x1xf32>
    tpu.vector_store %arg14[%c0_23, %c0_24], %39 {strides = array<i32>} : memref<1x1xf32, #tpu.memory_space<vmem>>, vector<1x1xf32>,
    %c0_25 = arith.constant 0 : index
    %c0_26 = arith.constant 0 : index
    %48 = vector.load %arg15[%c0_25, %c0_26] : memref<1x1xf32, #tpu.memory_space<vmem>>, vector<1x1xf32>
    tpu.vector_store %arg15[%c0_25, %c0_26], %34 {strides = array<i32>} : memref<1x1xf32, #tpu.memory_space<vmem>>, vector<1x1xf32>,
    %c0_27 = arith.constant 0 : index
    %c0_28 = arith.constant 0 : index
    %49 = vector.load %arg9[%c0_27, %c0_28] : memref<32x96xf32, #tpu.memory_space<vmem>>, vector<32x96xf32>
    %c0_29 = arith.constant 0 : index
    %c0_30 = arith.constant 0 : index
    %50 = vector.load %arg10[%c0_29, %c0_30] : memref<1x96xf32, #tpu.memory_space<vmem>>, vector<1x96xf32>
    %c0_31 = arith.constant 0 : index
    %c0_32 = arith.constant 0 : index
    %51 = vector.load %arg11[%c0_31, %c0_32] : memref<32x96xf32, #tpu.memory_space<vmem>>, vector<32x96xf32>
    %c0_33 = arith.constant 0 : index
    %c0_34 = arith.constant 0 : index
    %52 = vector.load %arg12[%c0_33, %c0_34] : memref<1x96xf32, #tpu.memory_space<vmem>>, vector<1x96xf32>
    %cst_35 = arith.constant dense<0.000000e+00> : vector<5x96xf32>
    %53 = tpu.matmul %46, %49, %cst_35 {dimension_numbers = #tpu.dot_dimension_numbers<[1], [0], [0], [1], [0, 0, 1, 1], [], []>} : vector<5x32xf32>, vector<32x96xf32>, vector<5x96xf32> -> vector<5x96xf32>
    %54 = vector.broadcast %50 : vector<1x96xf32> to vector<5x96xf32>
    %55 = arith.addf %53, %54 : vector<5x96xf32>
    %cst_36 = arith.constant dense<0.000000e+00> : vector<5x96xf32>
    %56 = tpu.matmul %9, %51, %cst_36 {dimension_numbers = #tpu.dot_dimension_numbers<[1], [0], [0], [1], [0, 0, 1, 1], [], []>} : vector<5x32xf32>, vector<32x96xf32>, vector<5x96xf32> -> vector<5x96xf32>
    %57 = vector.broadcast %52 : vector<1x96xf32> to vector<5x96xf32>
    %58 = arith.addf %56, %57 : vector<5x96xf32>
    %59 = vector.extract_strided_slice %55 {offsets = [0, 0], sizes = [5, 64], strides = [1, 1]} : vector<5x96xf32> to vector<5x64xf32>
    %60 = vector.extract_strided_slice %58 {offsets = [0, 0], sizes = [5, 64], strides = [1, 1]} : vector<5x96xf32> to vector<5x64xf32>
    %61 = arith.addf %59, %60 : vector<5x64xf32>
    %62 = arith.negf %61 : vector<5x64xf32>
    %63 = math.exp %62 : vector<5x64xf32>
    %cst_37 = arith.constant 1.000000e+00 : f32
    %64 = vector.broadcast %cst_37 : f32 to vector<5x64xf32>
    %65 = arith.addf %64, %63 : vector<5x64xf32>
    %66 = arith.divf %64, %65 : vector<5x64xf32>
    %67 = vector.extract_strided_slice %66 {offsets = [0, 0], sizes = [5, 32], strides = [1, 1]} : vector<5x64xf32> to vector<5x32xf32>
    %68 = vector.extract_strided_slice %66 {offsets = [0, 32], sizes = [5, 32], strides = [1, 1]} : vector<5x64xf32> to vector<5x32xf32>
    %69 = vector.extract_strided_slice %55 {offsets = [0, 64], sizes = [5, 32], strides = [1, 1]} : vector<5x96xf32> to vector<5x32xf32>
    %70 = vector.extract_strided_slice %58 {offsets = [0, 64], sizes = [5, 32], strides = [1, 1]} : vector<5x96xf32> to vector<5x32xf32>
    %71 = arith.mulf %67, %70 : vector<5x32xf32>
    %72 = arith.addf %69, %71 : vector<5x32xf32>
    %73 = math.tanh %72 : vector<5x32xf32>
    %cst_38 = arith.constant 1.000000e+00 : f32
    %74 = vector.broadcast %cst_38 : f32 to vector<5x32xf32>
    %75 = arith.subf %74, %68 : vector<5x32xf32>
    %76 = arith.mulf %75, %73 : vector<5x32xf32>
    %77 = arith.mulf %68, %9 : vector<5x32xf32>
    %78 = arith.addf %76, %77 : vector<5x32xf32>
    %79 = tpu.iota {dimensions = array<i32: 0>} : vector<8x5xi32>
    %c0_39 = arith.constant 0 : index
    %c0_40 = arith.constant 0 : index
    %80 = vector.load %arg1[%c0_39, %c0_40] : memref<1x5xi32, #tpu.memory_space<vmem>>, vector<1x5xi32>
    %81 = vector.broadcast %80 : vector<1x5xi32> to vector<8x5xi32>
    %82 = arith.cmpi eq, %79, %81 : vector<8x5xi32>
    %83 = arith.extui %82 : vector<8x5xi1> to vector<8x5xi32>
    %84 = arith.sitofp %83 : vector<8x5xi32> to vector<8x5xf32>
    %cst_41 = arith.constant dense<0.000000e+00> : vector<8xf32>
    %85 = vector.multi_reduction <add>, %84, %cst_41 [1] : vector<8x5xf32> to vector<8xf32>
    %86 = vector.shape_cast %85 : vector<8xf32> to vector<8x1xf32>
    %cst_42 = arith.constant 1.000000e+00 : f32
    %87 = vector.broadcast %cst_42 : f32 to vector<8x1xf32>
    %88 = arith.subf %87, %86 : vector<8x1xf32>
    %89 = vector.broadcast %88 : vector<8x1xf32> to vector<8x32xf32>
    %90 = arith.mulf %0, %89 : vector<8x32xf32>
    %cst_43 = arith.constant dense<0.000000e+00> : vector<8x32xf32>
    %91 = tpu.matmul %84, %78, %cst_43 {dimension_numbers = #tpu.dot_dimension_numbers<[1], [0], [0], [1], [0, 0, 1, 1], [], []>} : vector<8x5xf32>, vector<5x32xf32>, vector<8x32xf32> -> vector<8x32xf32>
    %92 = arith.addf %90, %91 : vector<8x32xf32>
    %c0_44 = arith.constant 0 : index
    %c0_45 = arith.constant 0 : index
    %93 = vector.load %arg13[%c0_44, %c0_45] : memref<8x32xf32, #tpu.memory_space<vmem>>, vector<8x32xf32>
    tpu.vector_store %arg13[%c0_44, %c0_45], %92 {strides = array<i32>} : memref<8x32xf32, #tpu.memory_space<vmem>>, vector<8x32xf32>,
    return
  }
}

</mosaic_0001>

<llo_original>
// kernel: gru_observation_cell.1
$region0: #{gru_observation_cell.1}
  #allocation0 [shape = 'u32[]', space=smem, size = 0x4, offset = 0x4, fixed_abs, tag = 'smem constant byte address 0x4 - core index']
  #allocation1 [shape = 'u32[144,128]{1,0:T(1,128)}', space=vmem, size = 0x12000, scoped, tag = 'internal scratch']
  %s0 = inlined_call_operand.vmem [shape: s32[5,1], index: 0, kind: input, shape index: {}]
  %s1 = inlined_call_operand.vmem [shape: s32[1,5], index: 1, kind: input, shape index: {}]
  %s2 = inlined_call_operand.vmem [shape: f32[5,4], index: 2, kind: input, shape index: {}]
  %s3 = inlined_call_operand.vmem [shape: f32[5,4], index: 3, kind: input, shape index: {}]
  %s4 = inlined_call_operand.vmem [shape: f32[5,32], index: 4, kind: input, shape index: {}]
  %s5 = inlined_call_operand.vmem [shape: f32[8,8], index: 5, kind: input, shape index: {}]
  %s6 = inlined_call_operand.vmem [shape: f32[8,32], index: 6, kind: input, shape index: {}]
  %s7 = inlined_call_operand.vmem [shape: f32[16,32], index: 7, kind: input, shape index: {}]
  %s8 = inlined_call_operand.vmem [shape: f32[1,32], index: 8, kind: input, shape index: {}]
  %s9 = inlined_call_operand.vmem [shape: f32[32,96], index: 9, kind: input, shape index: {}]
  %s10 = inlined_call_operand.vmem [shape: f32[1,96], index: 10, kind: input, shape index: {}]
  %s11 = inlined_call_operand.vmem [shape: f32[32,96], index: 11, kind: input, shape index: {}]
  %s12 = inlined_call_operand.vmem [shape: f32[1,96], index: 12, kind: input, shape index: {}]
  %s13 = inlined_call_operand.hbm [shape: f32[8,32], index: 13, kind: output, shape index: {0}]
  %s14 = inlined_call_operand.hbm [shape: f32[1,1], index: 14, kind: output, shape index: {1}]
  %s15 = inlined_call_operand.hbm [shape: f32[1,1], index: 15, kind: output, shape index: {2}]
  %16 = xla_tuple %s13, %s14, %s15
  %s17 = sld [smem:[#allocation0]]
  $region78: #{gru_observation_cell.1} parent=0
    _
  %s19 = ssub.s32 1, %s17
  %s20 = scalar_select 0, %s19, %s17
  $region1: #{gru_observation_cell.1} parent=0
    #allocation2 [shape = 'u8[4096]{0}', space=vmem, size = 0x1000, scoped, tag = 'output window, operand 0, single buffered']
    #allocation3 [shape = 's32[1]{0}', space=sflag, size = 0x4, scoped, tag = 'scoped memory for gru_observation_cell.1']
    #allocation4 [shape = 'u8[512]{0}', space=vmem, size = 0x400, scoped, tag = 'output window, operand 1, single buffered']
    #allocation5 [shape = 's32[1]{0}', space=sflag, size = 0x4, scoped, tag = 'scoped memory for gru_observation_cell.1']
    #allocation6 [shape = 'u8[512]{0}', space=vmem, size = 0x400, scoped, tag = 'output window, operand 2, single buffered']
    %21 = vsyncpa [#allocation3], 0
    %22 = vsyncpa [#allocation5], 0
    // Predicated region
    $region2: #{gru_observation_cell.1} parent=1 // pred_check
      _
    $region3: #{gru_observation_cell.1} parent=1 // pred_check_branch
      %24 = sbr.rel (0) target = $region5
    $region4: #{gru_observation_cell.1} parent=1 // pred_region
      _
    $region5: #{gru_observation_cell.1} parent=1 // pred_fallthru
      _
    // Predicated region
    $region6: #{gru_observation_cell.1} parent=1 // pred_check
      _
    $region7: #{gru_observation_cell.1} parent=1 // pred_check_branch
      %26 = sbr.rel (0) target = $region9
    $region8: #{gru_observation_cell.1} parent=1 // pred_region
      _
    $region9: #{gru_observation_cell.1} parent=1 // pred_fallthru
      _
    // Predicated region
    $region10: #{gru_observation_cell.1} parent=1 // pred_check
      _
    $region11: #{gru_observation_cell.1} parent=1 // pred_check_branch
      %28 = sbr.rel (0) target = $region13
    $region12: #{gru_observation_cell.1} parent=1 // pred_region
      _
    $region13: #{gru_observation_cell.1} parent=1 // pred_fallthru
      _
    // Predicated region
    $region14: #{gru_observation_cell.1} parent=1 // pred_check
      _
    $region15: #{gru_observation_cell.1} parent=1 // pred_check_branch
      %30 = sbr.rel (0) target = $region17
    $region16: #{gru_observation_cell.1} parent=1 // pred_region
      _
    $region17: #{gru_observation_cell.1} parent=1 // pred_fallthru
      _
    // Predicated region
    $region18: #{gru_observation_cell.1} parent=1 // pred_check
      _
    $region19: #{gru_observation_cell.1} parent=1 // pred_check_branch
      %32 = sbr.rel (0) target = $region21
    $region20: #{gru_observation_cell.1} parent=1 // pred_region
      _
    $region21: #{gru_observation_cell.1} parent=1 // pred_fallthru
      _
    // Predicated region
    $region22: #{gru_observation_cell.1} parent=1 // pred_check
      _
    $region23: #{gru_observation_cell.1} parent=1 // pred_check_branch
      %34 = sbr.rel (0) target = $region25
    $region24: #{gru_observation_cell.1} parent=1 // pred_region
      _
    $region25: #{gru_observation_cell.1} parent=1 // pred_fallthru
      _
    // Predicated region
    $region26: #{gru_observation_cell.1} parent=1 // pred_check
      _
    $region27: #{gru_observation_cell.1} parent=1 // pred_check_branch
      %36 = sbr.rel (0) target = $region29
    $region28: #{gru_observation_cell.1} parent=1 // pred_region
      _
    $region29: #{gru_observation_cell.1} parent=1 // pred_fallthru
      _
    // Predicated region
    $region30: #{gru_observation_cell.1} parent=1 // pred_check
      _
    $region31: #{gru_observation_cell.1} parent=1 // pred_check_branch
      %38 = sbr.rel (0) target = $region33
    $region32: #{gru_observation_cell.1} parent=1 // pred_region
      _
    $region33: #{gru_observation_cell.1} parent=1 // pred_fallthru
      _
    // Predicated region
    $region34: #{gru_observation_cell.1} parent=1 // pred_check
      _
    $region35: #{gru_observation_cell.1} parent=1 // pred_check_branch
      %40 = sbr.rel (0) target = $region37
    $region36: #{gru_observation_cell.1} parent=1 // pred_region
      _
    $region37: #{gru_observation_cell.1} parent=1 // pred_fallthru
      _
    // Predicated region
    $region38: #{gru_observation_cell.1} parent=1 // pred_check
      _
    $region39: #{gru_observation_cell.1} parent=1 // pred_check_branch
      %42 = sbr.rel (0) target = $region41
    $region40: #{gru_observation_cell.1} parent=1 // pred_region
      _
    $region41: #{gru_observation_cell.1} parent=1 // pred_fallthru
      _
    // Predicated region
    $region42: #{gru_observation_cell.1} parent=1 // pred_check
      _
    $region43: #{gru_observation_cell.1} parent=1 // pred_check_branch
      %44 = sbr.rel (0) target = $region45
    $region44: #{gru_observation_cell.1} parent=1 // pred_region
      _
    $region45: #{gru_observation_cell.1} parent=1 // pred_fallthru
      _
    // Predicated region
    $region46: #{gru_observation_cell.1} parent=1 // pred_check
      _
    $region47: #{gru_observation_cell.1} parent=1 // pred_check_branch
      %46 = sbr.rel (0) target = $region49
    $region48: #{gru_observation_cell.1} parent=1 // pred_region
      _
    $region49: #{gru_observation_cell.1} parent=1 // pred_fallthru
      _
    // Predicated region
    $region50: #{gru_observation_cell.1} parent=1 // pred_check
      _
    $region51: #{gru_observation_cell.1} parent=1 // pred_check_branch
      %48 = sbr.rel (0) target = $region53
    $region52: #{gru_observation_cell.1} parent=1 // pred_region
      _
    $region53: #{gru_observation_cell.1} parent=1 // pred_fallthru
      _
    %v49 = vld [vmem:[%s6] sm:$0xff]
    %v50 = vld [vmem:[%s5] sm:$0xff]
    %v51 = vlaneseq
    %v52 = vand.u32 %v51, 127
    %v53 = vld [vmem:[%s0] sm:$0x1f]
    %54 = vset.pattern.permute.xlu0 0
    %55 = vperm.xlu0 %54, %v53
    %v56 = vpop.permute.xlu0 %55
    %vm57 = vcmp.eq.s32.totalorder %v52, %v56
    %v58 = vsel %vm57, 1, 0
    %v59 = vcvt.s32.f32 %v58
    %vm60 = vcmask 64512
    %v62 = vsel %vm60, %v59, 0
    %64 = vmatprep.subr.mxu0 0.0
    %65 = vmatpush1.msra.mxu0 %v50
    %66 = vmatprep.subr.mxu0 0.0
    %67 = vmatpush1.msra.mxu0 0.0
    %68 = vmatprep.subr.mxu0 0.0
    %69 = vmatpush1.msra.mxu0 0.0
    %70 = vmatprep.subr.mxu0 0.0
    %71 = vmatpush1.msra.mxu0 0.0
    %72 = vmatprep.subr.mxu0 0.0
    %73 = vmatpush1.msra.mxu0 0.0
    %74 = vmatprep.subr.mxu0 0.0
    %75 = vmatpush1.msra.mxu0 0.0
    %76 = vmatprep.subr.mxu0 0.0
    %77 = vmatpush1.msra.mxu0 0.0
    %78 = vmatprep.subr.mxu0 0.0
    %79 = vmatpush1.msra.mxu0 0.0
    %80 = vmatprep.subr.mxu0 0.0
    %81 = vmatpush1.msra.mxu0 0.0
    %82 = vmatprep.subr.mxu0 0.0
    %83 = vmatpush1.msra.mxu0 0.0
    %84 = vmatprep.subr.mxu0 0.0
    %85 = vmatpush1.msra.mxu0 0.0
    %86 = vmatprep.subr.mxu0 0.0
    %87 = vmatpush1.msra.mxu0 0.0
    %88 = vmatprep.subr.mxu0 0.0
    %89 = vmatpush1.msra.mxu0 0.0
    %90 = vmatprep.subr.mxu0 0.0
    %91 = vmatpush1.msra.mxu0 0.0
    %92 = vmatprep.subr.mxu0 0.0
    %93 = vmatpush1.msra.mxu0 0.0
    %94 = vmatprep.subr.mxu0 0.0
    %95 = vmatpush1.msra.mxu0 0.0
    %96 = vmatprep.subr.mxu0 0.0
    %97 = vmatpush1.msra.mxu0 0.0
    %98 = vmatprep.subr.mxu0 0.0
    %99 = vmatpush1.msra.mxu0 0.0
    %100 = vmatprep.subr.mxu0 0.0
    %101 = vmatpush1.msra.mxu0 0.0
    %102 = vmatprep.subr.mxu0 0.0
    %103 = vmatpush1.msra.mxu0 0.0
    %104 = vmatprep.subr.mxu0 0.0
    %105 = vmatpush1.msra.mxu0 0.0
    %106 = vmatprep.subr.mxu0 0.0
    %107 = vmatpush1.msra.mxu0 0.0
    %108 = vmatprep.subr.mxu0 0.0
    %109 = vmatpush1.msra.mxu0 0.0
    %110 = vmatprep.subr.mxu0 0.0
    %111 = vmatpush1.msra.mxu0 0.0
    %112 = vmatprep.subr.mxu0 0.0
    %113 = vmatpush1.msra.mxu0 0.0
    %114 = vmatprep.subr.mxu0 0.0
    %115 = vmatpush1.msra.mxu0 0.0
    %116 = vmatprep.subr.mxu0 0.0
    %117 = vmatpush1.msra.mxu0 0.0
    %118 = vmatprep.subr.mxu0 0.0
    %119 = vmatpush1.msra.mxu0 0.0
    %120 = vmatprep.subr.mxu0 0.0
    %121 = vmatpush1.msra.mxu0 0.0
    %122 = vmatprep.subr.mxu0 0.0
    %123 = vmatpush1.msra.mxu0 0.0
    %124 = vmatprep.subr.mxu0 0.0
    %125 = vmatpush1.msra.mxu0 0.0
    %126 = vmatprep.subr.mxu0 0.0
    %127 = vmatpush1.msra.mxu0 0.0
    %128 = vmatprep.mubr.f32.mxu0 0.0
    %129 = vmatmul.mubr.f32.gmra.mrb[0].mxu0 %v62
    %v130 = vpop.f32.mrb[0].mxu0
    %v131 = vadd.f32 0.0, %v130
    %v132 = vpop.f32.mrb[0].mxu0
    %133 = vdwg.mxu0
    %134 = vmatprep.subr.mxu0 0.0
    %135 = vmatpush1.msra.mxu0 %v49
    %136 = vmatprep.subr.mxu0 0.0
    %137 = vmatpush1.msra.mxu0 0.0
    %138 = vmatprep.subr.mxu0 0.0
    %139 = vmatpush1.msra.mxu0 0.0
    %140 = vmatprep.subr.mxu0 0.0
    %141 = vmatpush1.msra.mxu0 0.0
    %142 = vmatprep.subr.mxu0 0.0
    %143 = vmatpush1.msra.mxu0 0.0
    %144 = vmatprep.subr.mxu0 0.0
    %145 = vmatpush1.msra.mxu0 0.0
    %146 = vmatprep.subr.mxu0 0.0
    %147 = vmatpush1.msra.mxu0 0.0
    %148 = vmatprep.subr.mxu0 0.0
    %149 = vmatpush1.msra.mxu0 0.0
    %150 = vmatprep.subr.mxu0 0.0
    %151 = vmatpush1.msra.mxu0 0.0
    %152 = vmatprep.subr.mxu0 0.0
    %153 = vmatpush1.msra.mxu0 0.0
    %154 = vmatprep.subr.mxu0 0.0
    %155 = vmatpush1.msra.mxu0 0.0
    %156 = vmatprep.subr.mxu0 0.0
    %157 = vmatpush1.msra.mxu0 0.0
    %158 = vmatprep.subr.mxu0 0.0
    %159 = vmatpush1.msra.mxu0 0.0
    %160 = vmatprep.subr.mxu0 0.0
    %161 = vmatpush1.msra.mxu0 0.0
    %162 = vmatprep.subr.mxu0 0.0
    %163 = vmatpush1.msra.mxu0 0.0
    %164 = vmatprep.subr.mxu0 0.0
    %165 = vmatpush1.msra.mxu0 0.0
    %166 = vmatprep.subr.mxu0 0.0
    %167 = vmatpush1.msra.mxu0 0.0
    %168 = vmatprep.subr.mxu0 0.0
    %169 = vmatpush1.msra.mxu0 0.0
    %170 = vmatprep.subr.mxu0 0.0
    %171 = vmatpush1.msra.mxu0 0.0
    %172 = vmatprep.subr.mxu0 0.0
    %173 = vmatpush1.msra.mxu0 0.0
    %174 = vmatprep.subr.mxu0 0.0
    %175 = vmatpush1.msra.mxu0 0.0
    %176 = vmatprep.subr.mxu0 0.0
    %177 = vmatpush1.msra.mxu0 0.0
    %178 = vmatprep.subr.mxu0 0.0
    %179 = vmatpush1.msra.mxu0 0.0
    %180 = vmatprep.subr.mxu0 0.0
    %181 = vmatpush1.msra.mxu0 0.0
    %182 = vmatprep.subr.mxu0 0.0
    %183 = vmatpush1.msra.mxu0 0.0
    %184 = vmatprep.subr.mxu0 0.0
    %185 = vmatpush1.msra.mxu0 0.0
    %186 = vmatprep.subr.mxu0 0.0
    %187 = vmatpush1.msra.mxu0 0.0
    %188 = vmatprep.subr.mxu0 0.0
    %189 = vmatpush1.msra.mxu0 0.0
    %190 = vmatprep.subr.mxu0 0.0
    %191 = vmatpush1.msra.mxu0 0.0
    %192 = vmatprep.subr.mxu0 0.0
    %193 = vmatpush1.msra.mxu0 0.0
    %194 = vmatprep.subr.mxu0 0.0
    %195 = vmatpush1.msra.mxu0 0.0
    %196 = vmatprep.subr.mxu0 0.0
    %197 = vmatpush1.msra.mxu0 0.0
    %198 = vmatprep.mubr.f32.mxu0 0.0
    %199 = vmatmul.mubr.f32.gmra.mrb[0].mxu0 %v62
    %v200 = vpop.f32.mrb[0].mxu0
    %v201 = vadd.f32 0.0, %v200
    %v202 = vpop.f32.mrb[0].mxu0
    %203 = vdwg.mxu0
    %v204 = vld [vmem:[%s2] sm:$0x1f]
    %v205 = vld [vmem:[%s3] sm:$0x1f]
    %v206 = vld [vmem:[%s4] sm:$0x1f]
    %v207 = vld [vmem:[%s7] sm:$0xff]
    %v208 = vld [vmem:[%s7 + $0x8] sm:$0xff]
    %v209 = vld [vmem:[%s8] sm:$0x1]
    %v210 = vand.u32 2147483647, %v131
    %v211 = vadd.f32 %v210, 1e-06
    %v212 = vrsqrt.pop %v211
    %v213 = vsub.f32 %v204, %v131
    %v214 = vmul.f32 %v213, %v213
    %216 = vrot.lane.b32.xlu0 %v212, 124
    %v217 = vpop.permute.xlu0 %216
    %v219 = vmul.f32 %v213, %v217
    %v220 = vmul.f32 %v214, %v205
    %v221 = vmul.f32 %v219, %v219
    %v222 = vlog2.pop %v211
    %v223 = vmul.f32 %v222, 0.6931472
    %225 = vrot.lane.b32.xlu0 %v223, 124
    %v226 = vpop.permute.xlu0 %225
    %v228 = vadd.f32 %v221, %v226
    %v229 = vmul.f32 %v228, %v205
    %231 = vrot.lane.b32.xlu0 %v229, 4
    %v232 = vpop.permute.xlu0 %231
    %vm234 = vcmask 31744
    %v235 = vsel %vm234, %v220, %v232
    %vm236 = vcmask 61440
    %v237 = vsel %vm236, %v235, 0.0
    %v238 = vrot.slane %v237, 4
    %v239 = vadd.f32 %v237, %v238
    %v240 = vrot.slane %v239, 2
    %v241 = vadd.f32 %v239, %v240
    %v242 = vrot.slane %v241, 1
    %v243 = vadd.f32 %v241, %v242
    %v244 = vsel %vm234, %v243, 0.0
    %245 = vadd.xlane.f32.xlu0 %v244
    %v246 = vpop.xlane.xlu0 %245
    %248 = vrot.lane.b32.xlu0 %v243, 124
    %v249 = vpop.permute.xlu0 %248
    %v251 = vsel %vm234, %v249, 0.0
    %252 = vadd.xlane.f32.xlu0 %v251
    %v253 = vpop.xlane.xlu0 %252
    %v254 = vmul.f32 %v253, 0.5
    %256 = vrot.lane.b32.xlu0 %v131, 4
    %v257 = vpop.permute.xlu0 %256
    %260 = vrot.lane.b32.xlu0 %v211, 4
    %v261 = vpop.permute.xlu0 %260
    %264 = vrot.lane.b32.xlu0 %v219, 12
    %v265 = vpop.permute.xlu0 %264
    %v267 = vsel %vm234, %v204, %v257
    %v268 = vsel %vm60, %v267, %v261
    %vm269 = vcmask 97280
    %v270 = vsel %vm269, %v268, %v265
    %v272 = vlaneseq
    %v273 = vshrl.u32 %v272, 7
    %v274 = vsub.s32 0, %v273
    %v275 = vrot.slane %v209, %v274
    %vm277 = vcmask 130048
    %v279 = vsel %vm277, %v270, 0
    %281 = vmatprep.subr.mxu0 0.0
    %282 = vmatpush1.msra.mxu0 %v207
    %283 = vmatprep.subr.mxu0 0.0
    %284 = vmatpush1.msra.mxu0 %v208
    %285 = vmatprep.subr.mxu0 0.0
    %286 = vmatpush1.msra.mxu0 0.0
    %287 = vmatprep.subr.mxu0 0.0
    %288 = vmatpush1.msra.mxu0 0.0
    %289 = vmatprep.subr.mxu0 0.0
    %290 = vmatpush1.msra.mxu0 0.0
    %291 = vmatprep.subr.mxu0 0.0
    %292 = vmatpush1.msra.mxu0 0.0
    %293 = vmatprep.subr.mxu0 0.0
    %294 = vmatpush1.msra.mxu0 0.0
    %295 = vmatprep.subr.mxu0 0.0
    %296 = vmatpush1.msra.mxu0 0.0
    %297 = vmatprep.subr.mxu0 0.0
    %298 = vmatpush1.msra.mxu0 0.0
    %299 = vmatprep.subr.mxu0 0.0
    %300 = vmatpush1.msra.mxu0 0.0
    %301 = vmatprep.subr.mxu0 0.0
    %302 = vmatpush1.msra.mxu0 0.0
    %303 = vmatprep.subr.mxu0 0.0
    %304 = vmatpush1.msra.mxu0 0.0
    %305 = vmatprep.subr.mxu0 0.0
    %306 = vmatpush1.msra.mxu0 0.0
    %307 = vmatprep.subr.mxu0 0.0
    %308 = vmatpush1.msra.mxu0 0.0
    %309 = vmatprep.subr.mxu0 0.0
    %310 = vmatpush1.msra.mxu0 0.0
    %311 = vmatprep.subr.mxu0 0.0
    %312 = vmatpush1.msra.mxu0 0.0
    %313 = vmatprep.subr.mxu0 0.0
    %314 = vmatpush1.msra.mxu0 0.0
    %315 = vmatprep.subr.mxu0 0.0
    %316 = vmatpush1.msra.mxu0 0.0
    %317 = vmatprep.subr.mxu0 0.0
    %318 = vmatpush1.msra.mxu0 0.0
    %319 = vmatprep.subr.mxu0 0.0
    %320 = vmatpush1.msra.mxu0 0.0
    %321 = vmatprep.subr.mxu0 0.0
    %322 = vmatpush1.msra.mxu0 0.0
    %323 = vmatprep.subr.mxu0 0.0
    %324 = vmatpush1.msra.mxu0 0.0
    %325 = vmatprep.subr.mxu0 0.0
    %326 = vmatpush1.msra.mxu0 0.0
    %327 = vmatprep.subr.mxu0 0.0
    %328 = vmatpush1.msra.mxu0 0.0
    %329 = vmatprep.subr.mxu0 0.0
    %330 = vmatpush1.msra.mxu0 0.0
    %331 = vmatprep.subr.mxu0 0.0
    %332 = vmatpush1.msra.mxu0 0.0
    %333 = vmatprep.subr.mxu0 0.0
    %334 = vmatpush1.msra.mxu0 0.0
    %335 = vmatprep.subr.mxu0 0.0
    %336 = vmatpush1.msra.mxu0 0.0
    %337 = vmatprep.subr.mxu0 0.0
    %338 = vmatpush1.msra.mxu0 0.0
    %339 = vmatprep.subr.mxu0 0.0
    %340 = vmatpush1.msra.mxu0 0.0
    %341 = vmatprep.subr.mxu0 0.0
    %342 = vmatpush1.msra.mxu0 0.0
    %343 = vmatprep.subr.mxu0 0.0
    %344 = vmatpush1.msra.mxu0 0.0
    %345 = vmatprep.mubr.f32.mxu0 0.0
    %346 = vmatmul.mubr.f32.gmra.mrb[0].mxu0 %v279
    %v347 = vpop.f32.mrb[0].mxu0
    %v348 = vadd.f32 %v275, %v347
    %v349 = vpop.f32.mrb[0].mxu0
    %350 = vdwg.mxu0
    %v351 = vmax.f32 %v348, 0.0
    %v352 = vmul.f32 %v351, %v206
    %vm353 = vcmask 0
    %354 = vst.msk [vmem:[#allocation4] sm:$0x1] %vm353, %v254
    %355 = vst.msk [vmem:[#allocation6] sm:$0x1] %vm353, %v246
    %v356 = vld [vmem:[%s9] sm:$0xff]
    %v357 = vld [vmem:[%s9 + $0x8] sm:$0xff]
    %v358 = vld [vmem:[%s9 + $0x10] sm:$0xff]
    %v359 = vld [vmem:[%s9 + $0x18] sm:$0xff]
    %v360 = vld [vmem:[%s10] sm:$0x1]
    %v361 = vld [vmem:[%s11] sm:$0xff]
    %v362 = vld [vmem:[%s11 + $0x8] sm:$0xff]
    %v363 = vld [vmem:[%s11 + $0x10] sm:$0xff]
    %v364 = vld [vmem:[%s11 + $0x18] sm:$0xff]
    %v365 = vld [vmem:[%s12] sm:$0x1]
    %v367 = vlaneseq
    %v368 = vshrl.u32 %v367, 7
    %v369 = vsub.s32 0, %v368
    %v370 = vrot.slane %v360, %v369
    %vm372 = vcmask 261120
    %v374 = vsel %vm372, %v352, 0
    %376 = vmatprep.subr.mxu0 0.0
    %377 = vmatpush1.msra.mxu0 %v356
    %378 = vmatprep.subr.mxu0 0.0
    %379 = vmatpush1.msra.mxu0 %v357
    %380 = vmatprep.subr.mxu0 0.0
    %381 = vmatpush1.msra.mxu0 %v358
    %382 = vmatprep.subr.mxu0 0.0
    %383 = vmatpush1.msra.mxu0 %v359
    %384 = vmatprep.subr.mxu0 0.0
    %385 = vmatpush1.msra.mxu0 0.0
    %386 = vmatprep.subr.mxu0 0.0
    %387 = vmatpush1.msra.mxu0 0.0
    %388 = vmatprep.subr.mxu0 0.0
    %389 = vmatpush1.msra.mxu0 0.0
    %390 = vmatprep.subr.mxu0 0.0
    %391 = vmatpush1.msra.mxu0 0.0
    %392 = vmatprep.subr.mxu0 0.0
    %393 = vmatpush1.msra.mxu0 0.0
    %394 = vmatprep.subr.mxu0 0.0
    %395 = vmatpush1.msra.mxu0 0.0
    %396 = vmatprep.subr.mxu0 0.0
    %397 = vmatpush1.msra.mxu0 0.0
    %398 = vmatprep.subr.mxu0 0.0
    %399 = vmatpush1.msra.mxu0 0.0
    %400 = vmatprep.subr.mxu0 0.0
    %401 = vmatpush1.msra.mxu0 0.0
    %402 = vmatprep.subr.mxu0 0.0
    %403 = vmatpush1.msra.mxu0 0.0
    %404 = vmatprep.subr.mxu0 0.0
    %405 = vmatpush1.msra.mxu0 0.0
    %406 = vmatprep.subr.mxu0 0.0
    %407 = vmatpush1.msra.mxu0 0.0
    %408 = vmatprep.subr.mxu0 0.0
    %409 = vmatpush1.msra.mxu0 0.0
    %410 = vmatprep.subr.mxu0 0.0
    %411 = vmatpush1.msra.mxu0 0.0
    %412 = vmatprep.subr.mxu0 0.0
    %413 = vmatpush1.msra.mxu0 0.0
    %414 = vmatprep.subr.mxu0 0.0
    %415 = vmatpush1.msra.mxu0 0.0
    %416 = vmatprep.subr.mxu0 0.0
    %417 = vmatpush1.msra.mxu0 0.0
    %418 = vmatprep.subr.mxu0 0.0
    %419 = vmatpush1.msra.mxu0 0.0
    %420 = vmatprep.subr.mxu0 0.0
    %421 = vmatpush1.msra.mxu0 0.0
    %422 = vmatprep.subr.mxu0 0.0
    %423 = vmatpush1.msra.mxu0 0.0
    %424 = vmatprep.subr.mxu0 0.0
    %425 = vmatpush1.msra.mxu0 0.0
    %426 = vmatprep.subr.mxu0 0.0
    %427 = vmatpush1.msra.mxu0 0.0
    %428 = vmatprep.subr.mxu0 0.0
    %429 = vmatpush1.msra.mxu0 0.0
    %430 = vmatprep.subr.mxu0 0.0
    %431 = vmatpush1.msra.mxu0 0.0
    %432 = vmatprep.subr.mxu0 0.0
    %433 = vmatpush1.msra.mxu0 0.0
    %434 = vmatprep.subr.mxu0 0.0
    %435 = vmatpush1.msra.mxu0 0.0
    %436 = vmatprep.subr.mxu0 0.0
    %437 = vmatpush1.msra.mxu0 0.0
    %438 = vmatprep.subr.mxu0 0.0
    %439 = vmatpush1.msra.mxu0 0.0
    %440 = vmatprep.mubr.f32.mxu0 0.0
    %441 = vmatmul.mubr.f32.gmra.mrb[0].mxu0 %v374
    %v442 = vpop.f32.mrb[0].mxu0
    %v443 = vadd.f32 %v370, %v442
    %v444 = vpop.f32.mrb[0].mxu0
    %445 = vdwg.mxu0
    %v447 = vlaneseq
    %v448 = vshrl.u32 %v447, 7
    %v449 = vsub.s32 0, %v448
    %v450 = vrot.slane %v365, %v449
    %v453 = vsel %vm372, %v201, 0
    %455 = vmatprep.subr.mxu0 0.0
    %456 = vmatpush1.msra.mxu0 %v361
    %457 = vmatprep.subr.mxu0 0.0
    %458 = vmatpush1.msra.mxu0 %v362
    %459 = vmatprep.subr.mxu0 0.0
    %460 = vmatpush1.msra.mxu0 %v363
    %461 = vmatprep.subr.mxu0 0.0
    %462 = vmatpush1.msra.mxu0 %v364
    %463 = vmatprep.subr.mxu0 0.0
    %464 = vmatpush1.msra.mxu0 0.0
    %465 = vmatprep.subr.mxu0 0.0
    %466 = vmatpush1.msra.mxu0 0.0
    %467 = vmatprep.subr.mxu0 0.0
    %468 = vmatpush1.msra.mxu0 0.0
    %469 = vmatprep.subr.mxu0 0.0
    %470 = vmatpush1.msra.mxu0 0.0
    %471 = vmatprep.subr.mxu0 0.0
    %472 = vmatpush1.msra.mxu0 0.0
    %473 = vmatprep.subr.mxu0 0.0
    %474 = vmatpush1.msra.mxu0 0.0
    %475 = vmatprep.subr.mxu0 0.0
    %476 = vmatpush1.msra.mxu0 0.0
    %477 = vmatprep.subr.mxu0 0.0
    %478 = vmatpush1.msra.mxu0 0.0
    %479 = vmatprep.subr.mxu0 0.0
    %480 = vmatpush1.msra.mxu0 0.0
    %481 = vmatprep.subr.mxu0 0.0
    %482 = vmatpush1.msra.mxu0 0.0
    %483 = vmatprep.subr.mxu0 0.0
    %484 = vmatpush1.msra.mxu0 0.0
    %485 = vmatprep.subr.mxu0 0.0
    %486 = vmatpush1.msra.mxu0 0.0
    %487 = vmatprep.subr.mxu0 0.0
    %488 = vmatpush1.msra.mxu0 0.0
    %489 = vmatprep.subr.mxu0 0.0
    %490 = vmatpush1.msra.mxu0 0.0
    %491 = vmatprep.subr.mxu0 0.0
    %492 = vmatpush1.msra.mxu0 0.0
    %493 = vmatprep.subr.mxu0 0.0
    %494 = vmatpush1.msra.mxu0 0.0
    %495 = vmatprep.subr.mxu0 0.0
    %496 = vmatpush1.msra.mxu0 0.0
    %497 = vmatprep.subr.mxu0 0.0
    %498 = vmatpush1.msra.mxu0 0.0
    %499 = vmatprep.subr.mxu0 0.0
    %500 = vmatpush1.msra.mxu0 0.0
    %501 = vmatprep.subr.mxu0 0.0
    %502 = vmatpush1.msra.mxu0 0.0
    %503 = vmatprep.subr.mxu0 0.0
    %504 = vmatpush1.msra.mxu0 0.0
    %505 = vmatprep.subr.mxu0 0.0
    %506 = vmatpush1.msra.mxu0 0.0
    %507 = vmatprep.subr.mxu0 0.0
    %508 = vmatpush1.msra.mxu0 0.0
    %509 = vmatprep.subr.mxu0 0.0
    %510 = vmatpush1.msra.mxu0 0.0
    %511 = vmatprep.subr.mxu0 0.0
    %512 = vmatpush1.msra.mxu0 0.0
    %513 = vmatprep.subr.mxu0 0.0
    %514 = vmatpush1.msra.mxu0 0.0
    %515 = vmatprep.subr.mxu0 0.0
    %516 = vmatpush1.msra.mxu0 0.0
    %517 = vmatprep.subr.mxu0 0.0
    %518 = vmatpush1.msra.mxu0 0.0
    %519 = vmatprep.mubr.f32.mxu0 0.0
    %520 = vmatmul.mubr.f32.gmra.mrb[0].mxu0 %v453
    %v521 = vpop.f32.mrb[0].mxu0
    %v522 = vadd.f32 %v450, %v521
    %v523 = vpop.f32.mrb[0].mxu0
    %524 = vdwg.mxu0
    %v525 = vadd.f32 %v443, %v522
    %v526 = vxor.u32 %v525, 2147483648
    %v527 = vmul.f32 %v526, 1.442695
    %v528 = vpow.pop %v527
    %v529 = vadd.f32 %v528, 1.0
    %v530 = vrcp.pop %v529
    %v531 = vmul.f32 1.0, %v530
    %533 = vrot.lane.b32.xlu0 %v522, 64
    %v534 = vpop.permute.xlu0 %533
    %v536 = vmul.f32 %v531, %v534
    %538 = vrot.lane.b32.xlu0 %v536, 64
    %v539 = vpop.permute.xlu0 %538
    %v541 = vadd.f32 %v443, %v539
    %v542 = vtanh.pop %v541
    %v543 = vsub.f32 1.0, %v531
    %545 = vrot.lane.b32.xlu0 %v542, 96
    %v546 = vpop.permute.xlu0 %545
    %v548 = vmul.f32 %v543, %v546
    %549 = vrot.lane.b32.xlu0 %v201, 32
    %v550 = vpop.permute.xlu0 %549
    %v552 = vmul.f32 %v531, %v550
    %v553 = vadd.f32 %v548, %v552
    %v554 = vlaneseq
    %v555 = vshrl.u32 %v554, 7
    %v556 = vld [vmem:[%s1] sm:$0x1]
    %v557 = vlaneseq
    %v558 = vshrl.u32 %v557, 7
    %v559 = vsub.s32 0, %v558
    %v560 = vrot.slane %v556, %v559
    %vm561 = vcmp.eq.s32.totalorder %v555, %v560
    %v562 = vsel %vm561, 1, 0
    %v563 = vcvt.s32.f32 %v562
    %vm564 = vcmask 39936
    %v565 = vsel %vm564, %v563, 0.0
    %566 = vadd.xlane.f32.xlu0 %v565
    %v567 = vpop.xlane.xlu0 %566
    %v568 = vsub.f32 1.0, %v567
    %v569 = vmul.f32 %v49, %v568
    %571 = vrot.lane.b32.xlu0 %v553, 96
    %v572 = vpop.permute.xlu0 %571
    %v574 = vsel %vm564, %v563, 0
    %vm576 = vcmask 1044480
    %v577 = vsel %vm576, %v572, 0
    %579 = vmatprep.subr.mxu0 0.0
    %580 = vmatpush1.msra.mxu0 %v577
    %581 = vmatprep.subr.mxu0 0.0
    %582 = vmatpush1.msra.mxu0 0.0
    %583 = vmatprep.subr.mxu0 0.0
    %584 = vmatpush1.msra.mxu0 0.0
    %585 = vmatprep.subr.mxu0 0.0
    %586 = vmatpush1.msra.mxu0 0.0
    %587 = vmatprep.subr.mxu0 0.0
    %588 = vmatpush1.msra.mxu0 0.0
    %589 = vmatprep.subr.mxu0 0.0
    %590 = vmatpush1.msra.mxu0 0.0
    %591 = vmatprep.subr.mxu0 0.0
    %592 = vmatpush1.msra.mxu0 0.0
    %593 = vmatprep.subr.mxu0 0.0
    %594 = vmatpush1.msra.mxu0 0.0
    %595 = vmatprep.subr.mxu0 0.0
    %596 = vmatpush1.msra.mxu0 0.0
    %597 = vmatprep.subr.mxu0 0.0
    %598 = vmatpush1.msra.mxu0 0.0
    %599 = vmatprep.subr.mxu0 0.0
    %600 = vmatpush1.msra.mxu0 0.0
    %601 = vmatprep.subr.mxu0 0.0
    %602 = vmatpush1.msra.mxu0 0.0
    %603 = vmatprep.subr.mxu0 0.0
    %604 = vmatpush1.msra.mxu0 0.0
    %605 = vmatprep.subr.mxu0 0.0
    %606 = vmatpush1.msra.mxu0 0.0
    %607 = vmatprep.subr.mxu0 0.0
    %608 = vmatpush1.msra.mxu0 0.0
    %609 = vmatprep.subr.mxu0 0.0
    %610 = vmatpush1.msra.mxu0 0.0
    %611 = vmatprep.subr.mxu0 0.0
    %612 = vmatpush1.msra.mxu0 0.0
    %613 = vmatprep.subr.mxu0 0.0
    %614 = vmatpush1.msra.mxu0 0.0
    %615 = vmatprep.subr.mxu0 0.0
    %616 = vmatpush1.msra.mxu0 0.0
    %617 = vmatprep.subr.mxu0 0.0
    %618 = vmatpush1.msra.mxu0 0.0
    %619 = vmatprep.subr.mxu0 0.0
    %620 = vmatpush1.msra.mxu0 0.0
    %621 = vmatprep.subr.mxu0 0.0
    %622 = vmatpush1.msra.mxu0 0.0
    %623 = vmatprep.subr.mxu0 0.0
    %624 = vmatpush1.msra.mxu0 0.0
    %625 = vmatprep.subr.mxu0 0.0
    %626 = vmatpush1.msra.mxu0 0.0
    %627 = vmatprep.subr.mxu0 0.0
    %628 = vmatpush1.msra.mxu0 0.0
    %629 = vmatprep.subr.mxu0 0.0
    %630 = vmatpush1.msra.mxu0 0.0
    %631 = vmatprep.subr.mxu0 0.0
    %632 = vmatpush1.msra.mxu0 0.0
    %633 = vmatprep.subr.mxu0 0.0
    %634 = vmatpush1.msra.mxu0 0.0
    %635 = vmatprep.subr.mxu0 0.0
    %636 = vmatpush1.msra.mxu0 0.0
    %637 = vmatprep.subr.mxu0 0.0
    %638 = vmatpush1.msra.mxu0 0.0
    %639 = vmatprep.subr.mxu0 0.0
    %640 = vmatpush1.msra.mxu0 0.0
    %641 = vmatprep.subr.mxu0 0.0
    %642 = vmatpush1.msra.mxu0 0.0
    %643 = vmatprep.mubr.f32.mxu0 0.0
    %644 = vmatmul.mubr.f32.gmra.mrb[0].mxu0 %v574
    %v645 = vpop.f32.mrb[0].mxu0
    %v646 = vadd.f32 0.0, %v645
    %v647 = vpop.f32.mrb[0].mxu0
    %648 = vdwg.mxu0
    %v649 = vadd.f32 %v569, %v646
    %650 = vst.msk [vmem:[#allocation2] sm:$0xff] %vm372, %v649
    // Predicated region
    $region54: #{gru_observation_cell.1} parent=1 // pred_check
      _
    $region55: #{gru_observation_cell.1} parent=1 // pred_check_branch
      %652 = sbr.rel (0) target = $region57
    $region56: #{gru_observation_cell.1} parent=1 // pred_region
      %s654 = ssub.s32 128, 128
      %655 = vsyncadd [#allocation3], %s654
      %s657 = sshll.u32 [#allocation2], 4
      %s658 = int_to_ptr.vmem [resolvable:$true] %s657
      %660 = dma.vmem_to_hbm [thread:$0]  %s658, 128, %s13, [#allocation3]
    $region57: #{gru_observation_cell.1} parent=1 // pred_fallthru
      _
    // Predicated region
    $region58: #{gru_observation_cell.1} parent=1 // pred_check
      _
    $region59: #{gru_observation_cell.1} parent=1 // pred_check_branch
      %662 = sbr.rel (0) target = $region61
    $region60: #{gru_observation_cell.1} parent=1 // pred_region
      %s664 = ssub.s32 16, 16
      %665 = vsyncadd [#allocation5], %s664
      %s667 = sshll.u32 [#allocation4], 4
      %s668 = int_to_ptr.vmem [resolvable:$true] %s667
      %670 = dma.vmem_to_hbm [thread:$0]  %s668, 16, %s14, [#allocation5]
    $region61: #{gru_observation_cell.1} parent=1 // pred_fallthru
      _
    // Predicated region
    $region62: #{gru_observation_cell.1} parent=1 // pred_check
      _
    $region63: #{gru_observation_cell.1} parent=1 // pred_check_branch
      %672 = sbr.rel (0) target = $region65
    $region64: #{gru_observation_cell.1} parent=1 // pred_region
      %s674 = ssub.s32 16, 16
      %675 = vsyncadd [#allocation5], %s674
      %s677 = sshll.u32 [#allocation6], 4
      %s678 = int_to_ptr.vmem [resolvable:$true] %s677
      %680 = dma.vmem_to_hbm [thread:$0]  %s678, 16, %s15, [#allocation5]
    $region65: #{gru_observation_cell.1} parent=1 // pred_fallthru
      _
    // Predicated region
    $region66: #{gru_observation_cell.1} parent=1 // pred_check
      _
    $region67: #{gru_observation_cell.1} parent=1 // pred_check_branch
      %682 = sbr.rel (0) target = $region69
    $region68: #{gru_observation_cell.1} parent=1 // pred_region
      %683 = dma.done [#allocation3], 128
    $region69: #{gru_observation_cell.1} parent=1 // pred_fallthru
      _
    // Predicated region
    $region70: #{gru_observation_cell.1} parent=1 // pred_check
      _
    $region71: #{gru_observation_cell.1} parent=1 // pred_check_branch
      %685 = sbr.rel (0) target = $region73
    $region72: #{gru_observation_cell.1} parent=1 // pred_region
      %686 = dma.done [#allocation5], 16
    $region73: #{gru_observation_cell.1} parent=1 // pred_fallthru
      _
    // Predicated region
    $region74: #{gru_observation_cell.1} parent=1 // pred_check
      _
    $region75: #{gru_observation_cell.1} parent=1 // pred_check_branch
      %688 = sbr.rel (0) target = $region77
    $region76: #{gru_observation_cell.1} parent=1 // pred_region
      %689 = dma.done [#allocation5], 16
    $region77: #{gru_observation_cell.1} parent=1 // pred_fallthru
      _
    %690 = vsyncpa [#allocation3], 1
    %691 = vsyncpa [#allocation5], 1

</llo_original>
